<compile_context>
chip_gen: v7x
topology: tpu7x:2x2x1
jax: 0.10.0
libtpu: 0.0.40
codegen_flags: <defaults>
</compile_context>

<pallas_src>
import jax
import jax.numpy as jnp
from jax.experimental import pallas as pl
from jax.experimental.pallas import tpu as pltpu

_PAD_BIAS = -1e30  # pad-lane bias: exp underflows to exactly 0 after max-subtract


def fused_linear_softmax_kernel(x_ref, w_ref, b_ref, o_ref):
    nc = o_ref.shape[-1]  # real number of classes (output block is lane-exact)
    # Single fused matmul on the MXU: (tb, in) bf16 @ (in, c_pad) bf16, f32 acc.
    logits = jnp.dot(x_ref[...], w_ref[...], preferred_element_type=jnp.float32)
    logits = logits + b_ref[...]
    # Numerically stable softmax over the lane-dense padded class axis.
    # Pad columns have weight exactly 0 and bias -1e30, so exp() on them is 0
    # and they do not perturb max/denominator.
    m = jnp.max(logits, axis=-1, keepdims=True)
    e = jnp.exp(logits - m)
    denom = jnp.sum(e, axis=-1, keepdims=True)
    # EUP approx reciprocal + one Newton step (VPU, otherwise idle here) so
    # probabilities are normalized to ~1e-6 instead of ~1e-3.
    r = pl.reciprocal(denom, approx=True)
    r = r * (2.0 - denom * r)
    # Store only the real classes: output writeback is (tb, nc), not (tb, 128).
    # TODO(synk): if profiling ever shows the narrow masked vst binding (most
    # likely v5e, 1 vst slot), lane-pack 32 rows x 4 classes per output row.
    o_ref[...] = (e[:, :nc] * r).astype(o_ref.dtype)


def _pick_batch_tile(batch, *, target=512, min_steps=8):
    """Batch tile: multiple of 8 sublanes, <= target, and small enough that the
    grid has >= min_steps steps (keeps the activation DMA double-buffered and
    gives v7x's 2 TensorCores several steps each). No full-batch fallback."""
    if batch <= 8:
        return batch                        # single full-extent block
    tb = -(-batch // min_steps)             # cdiv
    tb = max(8, ((tb + 7) // 8) * 8)        # round up to sublane multiple
    return min(tb, target)


def linear_classifier_forward(x, w1_t, b1, w2_t, b2, *, block_b=512):
    """x: (B, in_features); w1_t: (in_features, hidden); b1: (1, hidden);
    w2_t: (hidden, num_classes); b2: (1, num_classes).
    Returns softmax probabilities of shape (B, num_classes)."""
    B, in_features = x.shape
    num_classes = w2_t.shape[1]

    # ---- wrapper-side prep (tiny one-off XLA ops) --------------------------
    # Lane-dense padded class axis for the MXU / in-VMEM softmax math only.
    c_pad = ((num_classes + 127) // 128) * 128
    pad = c_pad - num_classes
    w2_p = jnp.pad(w2_t.astype(jnp.float32), ((0, 0), (0, pad)))           # zero cols
    b2_p = jnp.pad(b2.astype(jnp.float32), ((0, 0), (0, pad)),
                   constant_values=_PAD_BIAS)
    # Exact fusion of the two bias-linear layers (no activation in between).
    w_fused = w1_t.astype(jnp.float32) @ w2_p                              # (in, c_pad)
    b_fused = b1.astype(jnp.float32) @ w2_p + b2_p                         # (1, c_pad)
    # bf16 matmul operands (f32 accumulate); pad weight cols stay exactly 0.
    x_bf = x.astype(jnp.bfloat16)
    w_bf = w_fused.astype(jnp.bfloat16)

    tb = _pick_batch_tile(B, target=block_b)
    grid = (pl.cdiv(B, tb),)   # Pallas handles a partial last block

    cost = pl.CostEstimate(
        flops=2 * B * in_features * c_pad,
        transcendentals=B * (c_pad + 1),            # exp + reciprocal
        bytes_accessed=(2 * x_bf.size + 2 * w_bf.size + 4 * b_fused.size
                        + 4 * B * num_classes),
    )

    return pl.pallas_call(
        fused_linear_softmax_kernel,
        out_shape=jax.ShapeDtypeStruct((B, num_classes), jnp.float32),
        grid=grid,
        in_specs=[
            # batch-tiled, double-buffered activation stream
            pl.BlockSpec((tb, in_features), lambda i: (i, 0)),
            # fused weights / bias: constant block index -> DMA'd once, resident
            pl.BlockSpec((in_features, c_pad), lambda i: (0, 0)),
            pl.BlockSpec((1, c_pad), lambda i: (0, 0)),
        ],
        # last dim == full array dim (num_classes), so this is a legal block.
        out_specs=pl.BlockSpec((tb, num_classes), lambda i: (i, 0)),
        compiler_params=pltpu.CompilerParams(
            dimension_semantics=("parallel",)),   # megacore split on v7x
        cost_estimate=cost,
    )(x_bf, w_bf, b_fused)


def reference_forward(x, w1_t, b1, w2_t, b2):
    h = x @ w1_t + b1
    logits = h @ w2_t + b2
    return jax.nn.softmax(logits, axis=1)


if __name__ == "__main__":
    key = jax.random.PRNGKey(0)
    batch = 1024          # small (256 KiB of activations) but exercises the grid
    in_features = 64
    hidden_dim = 32
    num_classes = 4

    k_x, k_w1, k_b1, k_w2, k_b2 = jax.random.split(key, 5)

    x = jax.random.normal(k_x, (batch, in_features), dtype=jnp.float32)

    # nn.Linear(in_features, hidden_dim): weight (hidden, in), bias (hidden,)
    # Stored transposed for the kernel: (in, hidden).
    bound1 = 1.0 / jnp.sqrt(in_features)
    w1_t = jax.random.uniform(
        k_w1, (in_features, hidden_dim), minval=-bound1, maxval=bound1,
        dtype=jnp.float32)
    b1 = jax.random.uniform(
        k_b1, (1, hidden_dim), minval=-bound1, maxval=bound1, dtype=jnp.float32)

    # nn.Linear(hidden_dim, num_classes): weight (num_classes, hidden), bias (num_classes,)
    bound2 = 1.0 / jnp.sqrt(hidden_dim)
    w2_t = jax.random.uniform(
        k_w2, (hidden_dim, num_classes), minval=-bound2, maxval=bound2,
        dtype=jnp.float32)
    b2 = jax.random.uniform(
        k_b2, (1, num_classes), minval=-bound2, maxval=bound2, dtype=jnp.float32)

    out = linear_classifier_forward(x, w1_t, b1, w2_t, b2)
    out = jax.block_until_ready(out)

    ref = reference_forward(x, w1_t, b1, w2_t, b2)
    assert out.shape == (batch, num_classes)
    # Tolerances account for bf16 matmul operands (f32 accumulation) and the
    # layer fusion vs. the sequential f32 reference.
    assert jnp.allclose(out, ref, atol=8e-3, rtol=2e-2)
    # Newton-corrected reciprocal -> rows normalized to ~1e-6.
    assert jnp.allclose(jnp.sum(out, axis=1), jnp.ones((batch,)), atol=1e-3)

    print("KERNEL_OK")
</pallas_src>

<mosaic_0001>
module attributes {stable_mosaic.version = 11 : i64} {
  func.func @fused_linear_softmax_kernel(%arg0: i32, %arg1: memref<128x64xbf16, #tpu.memory_space<vmem>>, %arg2: memref<64x128xbf16, #tpu.memory_space<vmem>>, %arg3: memref<1x128xf32, #tpu.memory_space<vmem>>, %arg4: memref<128x4xf32, #tpu.memory_space<vmem>>) attributes {dimension_semantics = [#tpu.dimension_semantics<parallel>], iteration_bounds = array<i64: 8>, scalar_prefetch = 0 : i64, scratch_operands = 0 : i64, tpu.core_type = #tpu.core_type<tc>, window_params = [{transform_indices = @transform_0, window_bounds = array<i64: 128, 64>}, {pipeline_mode = #tpu.pipeline_mode<synchronous>, transform_indices = @transform_1, window_bounds = array<i64: 64, 128>}, {pipeline_mode = #tpu.pipeline_mode<synchronous>, transform_indices = @transform_2, window_bounds = array<i64: 1, 128>}, {transform_indices = @transform_3, window_bounds = array<i64: 128, 4>}]} {
    %c0 = arith.constant 0 : index
    %c0_0 = arith.constant 0 : index
    %0 = vector.load %arg1[%c0, %c0_0] : memref<128x64xbf16, #tpu.memory_space<vmem>>, vector<128x64xbf16>
    %c0_1 = arith.constant 0 : index
    %c0_2 = arith.constant 0 : index
    %1 = vector.load %arg2[%c0_1, %c0_2] : memref<64x128xbf16, #tpu.memory_space<vmem>>, vector<64x128xbf16>
    %cst = arith.constant dense<0.000000e+00> : vector<128x128xf32>
    %2 = tpu.matmul %0, %1, %cst {dimension_numbers = #tpu.dot_dimension_numbers<[1], [0], [0], [1], [0, 0, 1, 1], [], []>} : vector<128x64xbf16>, vector<64x128xbf16>, vector<128x128xf32> -> vector<128x128xf32>
    %c0_3 = arith.constant 0 : index
    %c0_4 = arith.constant 0 : index
    %3 = vector.load %arg3[%c0_3, %c0_4] : memref<1x128xf32, #tpu.memory_space<vmem>>, vector<1x128xf32>
    %4 = vector.broadcast %3 : vector<1x128xf32> to vector<128x128xf32>
    %5 = arith.addf %2, %4 : vector<128x128xf32>
    %cst_5 = arith.constant dense<0xFF800000> : vector<128xf32>
    %6 = vector.multi_reduction <maximumf>, %5, %cst_5 [1] : vector<128x128xf32> to vector<128xf32>
    %7 = vector.shape_cast %6 : vector<128xf32> to vector<128x1xf32>
    %8 = vector.broadcast %7 : vector<128x1xf32> to vector<128x128xf32>
    %9 = arith.subf %5, %8 : vector<128x128xf32>
    %10 = math.exp %9 : vector<128x128xf32>
    %cst_6 = arith.constant dense<0.000000e+00> : vector<128xf32>
    %11 = vector.multi_reduction <add>, %10, %cst_6 [1] : vector<128x128xf32> to vector<128xf32>
    %12 = vector.shape_cast %11 : vector<128xf32> to vector<128x1xf32>
    %13 = tpu.reciprocal %12 {approx = true} : vector<128x1xf32> -> vector<128x1xf32>
    %14 = arith.mulf %12, %13 : vector<128x1xf32>
    %cst_7 = arith.constant 2.000000e+00 : f32
    %15 = vector.broadcast %cst_7 : f32 to vector<128x1xf32>
    %16 = arith.subf %15, %14 : vector<128x1xf32>
    %17 = arith.mulf %13, %16 : vector<128x1xf32>
    %18 = vector.extract_strided_slice %10 {offsets = [0, 0], sizes = [128, 4], strides = [1, 1]} : vector<128x128xf32> to vector<128x4xf32>
    %19 = vector.broadcast %17 : vector<128x1xf32> to vector<128x4xf32>
    %20 = arith.mulf %18, %19 : vector<128x4xf32>
    %c0_8 = arith.constant 0 : index
    %c0_9 = arith.constant 0 : index
    %21 = vector.load %arg4[%c0_8, %c0_9] : memref<128x4xf32, #tpu.memory_space<vmem>>, vector<128x4xf32>
    tpu.vector_store %arg4[%c0_8, %c0_9], %20 {strides = array<i32>} : memref<128x4xf32, #tpu.memory_space<vmem>>, vector<128x4xf32>,
    return
  }
  func.func @transform_0(%arg0: i32) -> (i32, i32) {
    %c0_i32 = arith.constant 0 : i32
    %c0_i32_0 = arith.constant 0 : i32
    return %arg0, %c0_i32 : i32, i32
  }
  func.func @transform_1(%arg0: i32) -> (i32, i32) {
    %c0_i32 = arith.constant 0 : i32
    %c0_i32_0 = arith.constant 0 : i32
    %c0_i32_1 = arith.constant 0 : i32
    return %c0_i32, %c0_i32_0 : i32, i32
  }
  func.func @transform_2(%arg0: i32) -> (i32, i32) {
    %c0_i32 = arith.constant 0 : i32
    %c0_i32_0 = arith.constant 0 : i32
    %c0_i32_1 = arith.constant 0 : i32
    return %c0_i32, %c0_i32_0 : i32, i32
  }
  func.func @transform_3(%arg0: i32) -> (i32, i32) {
    %c0_i32 = arith.constant 0 : i32
    %c0_i32_0 = arith.constant 0 : i32
    return %arg0, %c0_i32 : i32, i32
  }
}

</mosaic_0001>

<llo_original>
// kernel: tpu_custom_call.1
$region0: #{tpu_custom_call.1}
  #allocation0 [shape = 'u32[]', space=smem, size = 0x4, offset = 0x4, fixed_abs, tag = 'smem constant byte address 0x4 - core index']
  #allocation1 [shape = 'u32[144,128]{1,0:T(1,128)}', space=vmem, size = 0x12000, scoped, tag = 'internal scratch']
  %s0 = inlined_call_operand.vmem [shape: bf16[1024,64], index: 0, kind: input, shape index: {}]
  %s1 = inlined_call_operand.vmem [shape: bf16[64,128], index: 1, kind: input, shape index: {}]
  %s2 = inlined_call_operand.vmem [shape: f32[1,128], index: 2, kind: input, shape index: {}]
  %s3 = inlined_call_operand.vmem [shape: f32[1024,4], index: 3, kind: output, shape index: {}]
  %s4 = sld [smem:[#allocation0]]
  $region45: #{tpu_custom_call.1} parent=0
    _
  %s6 = ssub.s32 1, %s4
  %s7 = scalar_select 0, %s6, %s4
  loop: start=0, step=1, limit=10
  $region2: #{tpu_custom_call.1} parent=0 // loop_pre_header
    _
  $region3: #{tpu_custom_call.1} parent=0 // loop_header
    %s9 = sphi 0, %s13
    %p10 = scmp.ge.s32.totalorder %s9, 10
    %s19 = sphi 0, %s21
    %s22 = sphi 0, %s19
    %s23 = sphi 0, %s22
    %s39 = sphi 0, %s23
    %s43 = sphi 0, %s43
    %s45 = sphi 0, %s43
    %s46 = sphi 0, %s45
    %s60 = sphi 0, %s46
    %s64 = sphi 0, %s64
    %s66 = sphi 0, %s64
    %s67 = sphi 0, %s66
    %s81 = sphi 0, %s67
    %s87 = sphi 0, %s89
    %s90 = sphi 0, %s87
    %s91 = sphi 0, %s90
    %s107 = sphi 0, %s91
  $region4: #{tpu_custom_call.1} parent=0 // loop_header_branch
    %12 = sbr.rel (%p10) target = $region8
  $region5: #{tpu_custom_call.1} parent=0 // loop_body
    %s14 = ssub.s32 %s9, 1
    %s15 = ssub.s32 %s9, 2
    %s16 = sadd.s32 %s9, 1
    %s17 = ssub.s32 %s9, %s16
    %p18 = scmp.eq.s32.totalorder %s17, 0
    %s20 = sadd.s32 %s19, 1
    %s21 = scalar_select %p18, %s19, %s20
    %p24 = pneg %p18
    %p25 = scmp.eq.s32.totalorder %s9, 7
    %p26 = por %p24, %p25
    %p27 = scmp.ne.s32.totalorder %s19, %s22
    %p28 = scmp.eq.s32.totalorder %s9, 0
    %p29 = por %p27, %p28
    %p30 = scmp.ne.s32.totalorder %s19, %s22
    %p31 = scmp.eq.s32.totalorder %s14, 7
    %p32 = por %p30, %p31
    %p33 = scmp.ne.s32.totalorder %s22, %s23
    %p34 = scmp.eq.s32.totalorder %s14, 0
    %p35 = por %p33, %p34
    %p36 = scmp.ne.s32.totalorder %s22, %s23
    %p37 = scmp.eq.s32.totalorder %s15, 7
    %p38 = por %p36, %p37
    %p40 = scmp.ne.s32.totalorder %s23, %s39
    %p41 = scmp.eq.s32.totalorder %s15, 0
    %p42 = por %p40, %p41
    %s44 = sadd.s32 %s43, 1
    %p47 = scmp.eq.s32.totalorder %s9, 7
    %p48 = scmp.ne.s32.totalorder %s43, %s45
    %p49 = scmp.eq.s32.totalorder %s9, 0
    %p50 = por %p48, %p49
    %p51 = scmp.ne.s32.totalorder %s43, %s45
    %p52 = scmp.eq.s32.totalorder %s14, 7
    %p53 = por %p51, %p52
    %p54 = scmp.ne.s32.totalorder %s45, %s46
    %p55 = scmp.eq.s32.totalorder %s14, 0
    %p56 = por %p54, %p55
    %p57 = scmp.ne.s32.totalorder %s45, %s46
    %p58 = scmp.eq.s32.totalorder %s15, 7
    %p59 = por %p57, %p58
    %p61 = scmp.ne.s32.totalorder %s46, %s60
    %p62 = scmp.eq.s32.totalorder %s15, 0
    %p63 = por %p61, %p62
    %s65 = sadd.s32 %s64, 1
    %p68 = scmp.eq.s32.totalorder %s9, 7
    %p69 = scmp.ne.s32.totalorder %s64, %s66
    %p70 = scmp.eq.s32.totalorder %s9, 0
    %p71 = por %p69, %p70
    %p72 = scmp.ne.s32.totalorder %s64, %s66
    %p73 = scmp.eq.s32.totalorder %s14, 7
    %p74 = por %p72, %p73
    %p75 = scmp.ne.s32.totalorder %s66, %s67
    %p76 = scmp.eq.s32.totalorder %s14, 0
    %p77 = por %p75, %p76
    %p78 = scmp.ne.s32.totalorder %s66, %s67
    %p79 = scmp.eq.s32.totalorder %s15, 7
    %p80 = por %p78, %p79
    %p82 = scmp.ne.s32.totalorder %s67, %s81
    %p83 = scmp.eq.s32.totalorder %s15, 0
    %p84 = por %p82, %p83
    %s85 = ssub.s32 %s9, %s16
    %p86 = scmp.eq.s32.totalorder %s85, 0
    %s88 = sadd.s32 %s87, 1
    %s89 = scalar_select %p86, %s87, %s88
    %p92 = pneg %p86
    %p93 = scmp.eq.s32.totalorder %s9, 7
    %p94 = por %p92, %p93
    %p95 = scmp.ne.s32.totalorder %s87, %s90
    %p96 = scmp.eq.s32.totalorder %s9, 0
    %p97 = por %p95, %p96
    %p98 = scmp.ne.s32.totalorder %s87, %s90
    %p99 = scmp.eq.s32.totalorder %s14, 7
    %p100 = por %p98, %p99
    %p101 = scmp.ne.s32.totalorder %s90, %s91
    %p102 = scmp.eq.s32.totalorder %s14, 0
    %p103 = por %p101, %p102
    %p104 = scmp.ne.s32.totalorder %s90, %s91
    %p105 = scmp.eq.s32.totalorder %s15, 7
    %p106 = por %p104, %p105
    %p108 = scmp.ne.s32.totalorder %s91, %s107
    %p109 = scmp.eq.s32.totalorder %s15, 0
    %p110 = por %p108, %p109
    %p111 = scmp.le.s32.totalorder 1, %s9
    %p112 = scmp.lt.s32.totalorder %s9, 9
    %p113 = pnand %p111, %p112
    %p114 = pneg %p113
    // Predicated region
    $region9: #{tpu_custom_call.1} parent=5 // pred_check
      _
    $region10: #{tpu_custom_call.1} parent=5 // pred_check_branch
      %116 = sbr.rel (%p113) target = $region12
    $region11: #{tpu_custom_call.1} parent=5 // pred_region
      %s117 = ssub.s32 %s9, 1
      // Predicated region
      $region13: #{tpu_custom_call.1} parent=11 // pred_check
        %p118 = pneg %p56
      $region14: #{tpu_custom_call.1} parent=11 // pred_check_branch
        %120 = sbr.rel (%p118) target = $region16
      $region15: #{tpu_custom_call.1} parent=11 // pred_region
        _
      $region16: #{tpu_custom_call.1} parent=11 // pred_fallthru
        _
      // Predicated region
      $region17: #{tpu_custom_call.1} parent=11 // pred_check
        %p121 = pneg %p77
      $region18: #{tpu_custom_call.1} parent=11 // pred_check_branch
        %123 = sbr.rel (%p121) target = $region20
      $region19: #{tpu_custom_call.1} parent=11 // pred_region
        _
      $region20: #{tpu_custom_call.1} parent=11 // pred_fallthru
        _
    $region12: #{tpu_custom_call.1} parent=5 // pred_fallthru
      _
    %p124 = scmp.lt.s32.totalorder %s9, 8
    // Predicated region
    $region21: #{tpu_custom_call.1} parent=5 // pred_check
      %p125 = pneg %p124
    $region22: #{tpu_custom_call.1} parent=5 // pred_check_branch
      %127 = sbr.rel (%p125) target = $region24
    $region23: #{tpu_custom_call.1} parent=5 // pred_region
      // Predicated region
      $region25: #{tpu_custom_call.1} parent=23 // pred_check
        %p128 = pneg %p29
      $region26: #{tpu_custom_call.1} parent=23 // pred_check_branch
        %130 = sbr.rel (%p128) target = $region28
      $region27: #{tpu_custom_call.1} parent=23 // pred_region
        %s131 = smul.u32 16, %s9
        %p132 = scmp.lt.s32.totalorder %s131, 127
        %s133 = scalar_select %p132, %s131, 127
        %s134 = smul.addr %s133, 4
        %s135 = scalar_lea.vmem %s0, %s134
        %s136 = smul.u32 16, %s9
      $region28: #{tpu_custom_call.1} parent=23 // pred_fallthru
        _
    $region24: #{tpu_custom_call.1} parent=5 // pred_fallthru
      _
    %p137 = scmp.le.s32.totalorder 1, %s9
    %p138 = scmp.lt.s32.totalorder %s9, 9
    %p139 = pnand %p137, %p138
    %p140 = pneg %p139
    // Predicated region
    $region29: #{tpu_custom_call.1} parent=5 // pred_check
      _
    $region30: #{tpu_custom_call.1} parent=5 // pred_check_branch
      %142 = sbr.rel (%p139) target = $region32
    $region31: #{tpu_custom_call.1} parent=5 // pred_region
      %s143 = ssub.s32 %s9, 1
      %s144 = smul.u32 16, %s14
      %p145 = scmp.lt.s32.totalorder %s144, 127
      %s146 = scalar_select %p145, %s144, 127
      %s147 = smul.addr %s146, 4
      %s148 = scalar_lea.vmem %s0, %s147
      %p149 = pneg %p35
      %p150 = pneg %p32
      %p151 = pneg %p56
      %p152 = pneg %p53
      %p153 = pneg %p77
      %p154 = pneg %p74
      %p155 = pneg %p103
      %p156 = pneg %p100
      %s157 = smul.u32 16, %s14
      %p158 = scmp.lt.s32.totalorder %s157, 127
      %s159 = scalar_select %p158, %s157, 127
      %s160 = smul.addr %s159, 8
      %s161 = scalar_lea.vmem %s3, %s160
      %s162 = smul.u32 16, %s14
      %p163 = scmp.lt.s32.totalorder %s162, 127
      %s164 = scalar_select %p163, %s162, 127
      %s165 = smul.addr %s164, 4
      %s166 = scalar_lea.vmem %s0, %s165
      %s167 = smul.u32 16, %s14
      %s168 = smul.u32 16, %s14
      %p169 = scmp.lt.s32.totalorder %s168, 127
      %s170 = scalar_select %p169, %s168, 127
      %s171 = smul.addr %s170, 8
      %s172 = scalar_lea.vmem %s3, %s171
      %s173 = smul.u32 16, %s14
      %v175 = vld [vmem:[%s166] sm:$0xf]
      %v176 = vld [vmem:[%s166 + $0x4] sm:$0xf]
      %v177 = vld [vmem:[%s166 + $0x8] sm:$0xf]
      %v178 = vld [vmem:[%s166 + $0xc] sm:$0xf]
      %v179 = vld [vmem:[%s166 + $0x10] sm:$0xf]
      %v180 = vld [vmem:[%s166 + $0x14] sm:$0xf]
      %v181 = vld [vmem:[%s166 + $0x18] sm:$0xf]
      %v182 = vld [vmem:[%s166 + $0x1c] sm:$0xf]
      %v183 = vld [vmem:[%s166 + $0x20] sm:$0xf]
      %v184 = vld [vmem:[%s166 + $0x24] sm:$0xf]
      %v185 = vld [vmem:[%s166 + $0x28] sm:$0xf]
      %v186 = vld [vmem:[%s166 + $0x2c] sm:$0xf]
      %v187 = vld [vmem:[%s166 + $0x30] sm:$0xf]
      %v188 = vld [vmem:[%s166 + $0x34] sm:$0xf]
      %v189 = vld [vmem:[%s166 + $0x38] sm:$0xf]
      %v190 = vld [vmem:[%s166 + $0x3c] sm:$0xf]
      %v191 = vld [vmem:[%s1] sm:$0xf]
      %v192 = vld [vmem:[%s1 + $0x4] sm:$0xf]
      %v193 = vld [vmem:[%s1 + $0x8] sm:$0xf]
      %v194 = vld [vmem:[%s1 + $0xc] sm:$0xf]
      %v195 = vld [vmem:[%s1 + $0x10] sm:$0xf]
      %v196 = vld [vmem:[%s1 + $0x14] sm:$0xf]
      %v197 = vld [vmem:[%s1 + $0x18] sm:$0xf]
      %v198 = vld [vmem:[%s1 + $0x1c] sm:$0xf]
      %v199 = vld [vmem:[%s2] sm:$0x1]
      %v201 = vlaneseq
      %v202 = vshrl.u32 %v201, 7
      %v203 = vsub.s32 0, %v202
      %v204 = vrot.slane %v199, %v203
      %v222 = vunpack.c.l.b16 %v175
      %v223 = vunpack.c.l.b16 %v176
      %v224 = vunpack.c.l.b16 %v177
      %v225 = vunpack.c.l.b16 %v178
      %v226 = vunpack.c.l.b16 %v179
      %v227 = vunpack.c.l.b16 %v180
      %v228 = vunpack.c.l.b16 %v181
      %v229 = vunpack.c.l.b16 %v182
      %v230 = vunpack.c.l.b16 %v183
      %v231 = vunpack.c.l.b16 %v184
      %v232 = vunpack.c.l.b16 %v185
      %v233 = vunpack.c.l.b16 %v186
      %v234 = vunpack.c.l.b16 %v187
      %v235 = vunpack.c.l.b16 %v188
      %v236 = vunpack.c.l.b16 %v189
      %v237 = vunpack.c.l.b16 %v190
      %v238 = vpack.c.b16 %v223, %v222
      %v239 = vpack.c.b16 %v225, %v224
      %v240 = vpack.c.b16 %v227, %v226
      %v241 = vpack.c.b16 %v229, %v228
      %v242 = vpack.c.b16 %v231, %v230
      %v243 = vpack.c.b16 %v233, %v232
      %v244 = vpack.c.b16 %v235, %v234
      %v245 = vpack.c.b16 %v237, %v236
      %v254 = vunpack.c.l.b16 %v191
      %v255 = vunpack.c.l.b16 %v192
      %v256 = vunpack.c.l.b16 %v193
      %v257 = vunpack.c.l.b16 %v194
      %v258 = vunpack.c.l.b16 %v195
      %v259 = vunpack.c.l.b16 %v196
      %v260 = vunpack.c.l.b16 %v197
      %v261 = vunpack.c.l.b16 %v198
      %v262 = vpack.c.b16 %v255, %v254
      %v263 = vpack.c.b16 %v257, %v256
      %v264 = vpack.c.b16 %v259, %v258
      %v265 = vpack.c.b16 %v261, %v260
      %vm270 = vcmask 523264
      %v272 = vsel %vm270, %v238, 0
      %v275 = vsel %vm270, %v239, 0
      %v278 = vsel %vm270, %v240, 0
      %v281 = vsel %vm270, %v241, 0
      %v284 = vsel %vm270, %v242, 0
      %v287 = vsel %vm270, %v243, 0
      %v290 = vsel %vm270, %v244, 0
      %v293 = vsel %vm270, %v245, 0
      %295 = vmatprep.subr.bf16.mxu0 0
      %296 = vmatpush1.bf16.msra.mxu0 %v262
      %297 = vmatprep.subr.bf16.mxu0 0
      %298 = vmatpush1.bf16.msra.mxu0 %v263
      %299 = vmatprep.subr.bf16.mxu0 0
      %300 = vmatpush1.bf16.msra.mxu0 %v264
      %301 = vmatprep.subr.bf16.mxu0 0
      %302 = vmatpush1.bf16.msra.mxu0 %v265
      %303 = vmatprep.subr.bf16.mxu0 0
      %304 = vmatpush1.bf16.msra.mxu0 0
      %305 = vmatprep.subr.bf16.mxu0 0
      %306 = vmatpush1.bf16.msra.mxu0 0
      %307 = vmatprep.subr.bf16.mxu0 0
      %308 = vmatpush1.bf16.msra.mxu0 0
      %309 = vmatprep.subr.bf16.mxu0 0
      %310 = vmatpush1.bf16.msra.mxu0 0
      %311 = vmatprep.subr.bf16.mxu0 0
      %312 = vmatpush1.bf16.msra.mxu0 0
      %313 = vmatprep.subr.bf16.mxu0 0
      %314 = vmatpush1.bf16.msra.mxu0 0
      %315 = vmatprep.subr.bf16.mxu0 0
      %316 = vmatpush1.bf16.msra.mxu0 0
      %317 = vmatprep.subr.bf16.mxu0 0
      %318 = vmatpush1.bf16.msra.mxu0 0
      %319 = vmatprep.subr.bf16.mxu0 0
      %320 = vmatpush1.bf16.msra.mxu0 0
      %321 = vmatprep.subr.bf16.mxu0 0
      %322 = vmatpush1.bf16.msra.mxu0 0
      %323 = vmatprep.subr.bf16.mxu0 0
      %324 = vmatpush1.bf16.msra.mxu0 0
      %325 = vmatprep.subr.bf16.mxu0 0
      %326 = vmatpush1.bf16.msra.mxu0 0
      %327 = vmatprep.mubr.bf16.mxu0 0
      %328 = vmatmul.mubr.bf16.gmra.mrb[0].mxu0 %v272
      %v329 = vpop.f32.mrb[0].mxu0
      %v330 = vadd.f32 %v204, %v329
      %v331 = vpop.f32.mrb[0].mxu0
      %v332 = vpop.f32.mrb[0].mxu0
      %v333 = vadd.f32 %v204, %v332
      %v334 = vpop.f32.mrb[0].mxu0
      %335 = vmatprep.mubr.bf16.mxu0 0
      %336 = vmatmul.mubr.bf16.gmra.mrb[0].mxu0 %v275
      %v337 = vpop.f32.mrb[0].mxu0
      %v338 = vadd.f32 %v204, %v337
      %v339 = vpop.f32.mrb[0].mxu0
      %v340 = vpop.f32.mrb[0].mxu0
      %v341 = vadd.f32 %v204, %v340
      %v342 = vpop.f32.mrb[0].mxu0
      %343 = vmatprep.mubr.bf16.mxu0 0
      %344 = vmatmul.mubr.bf16.gmra.mrb[0].mxu0 %v278
      %v345 = vpop.f32.mrb[0].mxu0
      %v346 = vadd.f32 %v204, %v345
      %v347 = vpop.f32.mrb[0].mxu0
      %v348 = vpop.f32.mrb[0].mxu0
      %v349 = vadd.f32 %v204, %v348
      %v350 = vpop.f32.mrb[0].mxu0
      %351 = vmatprep.mubr.bf16.mxu0 0
      %352 = vmatmul.mubr.bf16.gmra.mrb[0].mxu0 %v281
      %v353 = vpop.f32.mrb[0].mxu0
      %v354 = vadd.f32 %v204, %v353
      %v355 = vpop.f32.mrb[0].mxu0
      %v356 = vpop.f32.mrb[0].mxu0
      %v357 = vadd.f32 %v204, %v356
      %v358 = vpop.f32.mrb[0].mxu0
      %359 = vmatprep.mubr.bf16.mxu0 0
      %360 = vmatmul.mubr.bf16.gmra.mrb[0].mxu0 %v284
      %v361 = vpop.f32.mrb[0].mxu0
      %v362 = vadd.f32 %v204, %v361
      %v363 = vpop.f32.mrb[0].mxu0
      %v364 = vpop.f32.mrb[0].mxu0
      %v365 = vadd.f32 %v204, %v364
      %v366 = vpop.f32.mrb[0].mxu0
      %367 = vmatprep.mubr.bf16.mxu0 0
      %368 = vmatmul.mubr.bf16.gmra.mrb[0].mxu0 %v287
      %v369 = vpop.f32.mrb[0].mxu0
      %v370 = vadd.f32 %v204, %v369
      %v371 = vpop.f32.mrb[0].mxu0
      %v372 = vpop.f32.mrb[0].mxu0
      %v373 = vadd.f32 %v204, %v372
      %v374 = vpop.f32.mrb[0].mxu0
      %375 = vmatprep.mubr.bf16.mxu0 0
      %376 = vmatmul.mubr.bf16.gmra.mrb[0].mxu0 %v290
      %v377 = vpop.f32.mrb[0].mxu0
      %v378 = vadd.f32 %v204, %v377
      %v379 = vpop.f32.mrb[0].mxu0
      %v380 = vpop.f32.mrb[0].mxu0
      %v381 = vadd.f32 %v204, %v380
      %v382 = vpop.f32.mrb[0].mxu0
      %383 = vmatprep.mubr.bf16.mxu0 0
      %384 = vmatmul.mubr.bf16.gmra.mrb[0].mxu0 %v293
      %v385 = vpop.f32.mrb[0].mxu0
      %v386 = vadd.f32 %v204, %v385
      %v387 = vpop.f32.mrb[0].mxu0
      %v388 = vpop.f32.mrb[0].mxu0
      %v389 = vadd.f32 %v204, %v388
      %v390 = vpop.f32.mrb[0].mxu0
      %391 = vdwg.mxu0
      %392 = vmax.xlane.f32.xlu0 %v330
      %v393 = vpop.xlane.xlu0 %392
      %394 = vmax.xlane.f32.xlu0 %v333
      %v395 = vpop.xlane.xlu0 %394
      %396 = vmax.xlane.f32.xlu0 %v338
      %v397 = vpop.xlane.xlu0 %396
      %398 = vmax.xlane.f32.xlu0 %v341
      %v399 = vpop.xlane.xlu0 %398
      %400 = vmax.xlane.f32.xlu0 %v346
      %v401 = vpop.xlane.xlu0 %400
      %402 = vmax.xlane.f32.xlu0 %v349
      %v403 = vpop.xlane.xlu0 %402
      %404 = vmax.xlane.f32.xlu0 %v354
      %v405 = vpop.xlane.xlu0 %404
      %406 = vmax.xlane.f32.xlu0 %v357
      %v407 = vpop.xlane.xlu0 %406
      %408 = vmax.xlane.f32.xlu0 %v362
      %v409 = vpop.xlane.xlu0 %408
      %410 = vmax.xlane.f32.xlu0 %v365
      %v411 = vpop.xlane.xlu0 %410
      %412 = vmax.xlane.f32.xlu0 %v370
      %v413 = vpop.xlane.xlu0 %412
      %414 = vmax.xlane.f32.xlu0 %v373
      %v415 = vpop.xlane.xlu0 %414
      %416 = vmax.xlane.f32.xlu0 %v378
      %v417 = vpop.xlane.xlu0 %416
      %418 = vmax.xlane.f32.xlu0 %v381
      %v419 = vpop.xlane.xlu0 %418
      %420 = vmax.xlane.f32.xlu0 %v386
      %v421 = vpop.xlane.xlu0 %420
      %422 = vmax.xlane.f32.xlu0 %v389
      %v423 = vpop.xlane.xlu0 %422
      %v424 = vsub.f32 %v330, %v393
      %v425 = vsub.f32 %v333, %v395
      %v426 = vsub.f32 %v338, %v397
      %v427 = vsub.f32 %v341, %v399
      %v428 = vsub.f32 %v346, %v401
      %v429 = vsub.f32 %v349, %v403
      %v430 = vsub.f32 %v354, %v405
      %v431 = vsub.f32 %v357, %v407
      %v432 = vsub.f32 %v362, %v409
      %v433 = vsub.f32 %v365, %v411
      %v434 = vsub.f32 %v370, %v413
      %v435 = vsub.f32 %v373, %v415
      %v436 = vsub.f32 %v378, %v417
      %v437 = vsub.f32 %v381, %v419
      %v438 = vsub.f32 %v386, %v421
      %v439 = vsub.f32 %v389, %v423
      %v440 = vmul.f32 %v424, 1.442695
      %v441 = vpow.pop %v440
      %v442 = vmul.f32 %v425, 1.442695
      %v443 = vpow.pop %v442
      %v444 = vmul.f32 %v426, 1.442695
      %v445 = vpow.pop %v444
      %v446 = vmul.f32 %v427, 1.442695
      %v447 = vpow.pop %v446
      %v448 = vmul.f32 %v428, 1.442695
      %v449 = vpow.pop %v448
      %v450 = vmul.f32 %v429, 1.442695
      %v451 = vpow.pop %v450
      %v452 = vmul.f32 %v430, 1.442695
      %v453 = vpow.pop %v452
      %v454 = vmul.f32 %v431, 1.442695
      %v455 = vpow.pop %v454
      %v456 = vmul.f32 %v432, 1.442695
      %v457 = vpow.pop %v456
      %v458 = vmul.f32 %v433, 1.442695
      %v459 = vpow.pop %v458
      %v460 = vmul.f32 %v434, 1.442695
      %v461 = vpow.pop %v460
      %v462 = vmul.f32 %v435, 1.442695
      %v463 = vpow.pop %v462
      %v464 = vmul.f32 %v436, 1.442695
      %v465 = vpow.pop %v464
      %v466 = vmul.f32 %v437, 1.442695
      %v467 = vpow.pop %v466
      %v468 = vmul.f32 %v438, 1.442695
      %v469 = vpow.pop %v468
      %v470 = vmul.f32 %v439, 1.442695
      %v471 = vpow.pop %v470
      %472 = vadd.xlane.f32.xlu0 %v441
      %v473 = vpop.xlane.xlu0 %472
      %474 = vadd.xlane.f32.xlu0 %v443
      %v475 = vpop.xlane.xlu0 %474
      %476 = vadd.xlane.f32.xlu0 %v445
      %v477 = vpop.xlane.xlu0 %476
      %478 = vadd.xlane.f32.xlu0 %v447
      %v479 = vpop.xlane.xlu0 %478
      %480 = vadd.xlane.f32.xlu0 %v449
      %v481 = vpop.xlane.xlu0 %480
      %482 = vadd.xlane.f32.xlu0 %v451
      %v483 = vpop.xlane.xlu0 %482
      %484 = vadd.xlane.f32.xlu0 %v453
      %v485 = vpop.xlane.xlu0 %484
      %486 = vadd.xlane.f32.xlu0 %v455
      %v487 = vpop.xlane.xlu0 %486
      %488 = vadd.xlane.f32.xlu0 %v457
      %v489 = vpop.xlane.xlu0 %488
      %490 = vadd.xlane.f32.xlu0 %v459
      %v491 = vpop.xlane.xlu0 %490
      %492 = vadd.xlane.f32.xlu0 %v461
      %v493 = vpop.xlane.xlu0 %492
      %494 = vadd.xlane.f32.xlu0 %v463
      %v495 = vpop.xlane.xlu0 %494
      %496 = vadd.xlane.f32.xlu0 %v465
      %v497 = vpop.xlane.xlu0 %496
      %498 = vadd.xlane.f32.xlu0 %v467
      %v499 = vpop.xlane.xlu0 %498
      %500 = vadd.xlane.f32.xlu0 %v469
      %v501 = vpop.xlane.xlu0 %500
      %502 = vadd.xlane.f32.xlu0 %v471
      %v503 = vpop.xlane.xlu0 %502
      %v504 = vrcp.pop %v473
      %v505 = vrcp.pop %v475
      %v506 = vrcp.pop %v477
      %v507 = vrcp.pop %v479
      %v508 = vrcp.pop %v481
      %v509 = vrcp.pop %v483
      %v510 = vrcp.pop %v485
      %v511 = vrcp.pop %v487
      %v512 = vrcp.pop %v489
      %v513 = vrcp.pop %v491
      %v514 = vrcp.pop %v493
      %v515 = vrcp.pop %v495
      %v516 = vrcp.pop %v497
      %v517 = vrcp.pop %v499
      %v518 = vrcp.pop %v501
      %v519 = vrcp.pop %v503
      %v520 = vmul.f32 %v473, %v504
      %v521 = vmul.f32 %v475, %v505
      %v522 = vmul.f32 %v477, %v506
      %v523 = vmul.f32 %v479, %v507
      %v524 = vmul.f32 %v481, %v508
      %v525 = vmul.f32 %v483, %v509
      %v526 = vmul.f32 %v485, %v510
      %v527 = vmul.f32 %v487, %v511
      %v528 = vmul.f32 %v489, %v512
      %v529 = vmul.f32 %v491, %v513
      %v530 = vmul.f32 %v493, %v514
      %v531 = vmul.f32 %v495, %v515
      %v532 = vmul.f32 %v497, %v516
      %v533 = vmul.f32 %v499, %v517
      %v534 = vmul.f32 %v501, %v518
      %v535 = vmul.f32 %v503, %v519
      %v536 = vsub.f32 2.0, %v520
      %v537 = vsub.f32 2.0, %v521
      %v538 = vsub.f32 2.0, %v522
      %v539 = vsub.f32 2.0, %v523
      %v540 = vsub.f32 2.0, %v524
      %v541 = vsub.f32 2.0, %v525
      %v542 = vsub.f32 2.0, %v526
      %v543 = vsub.f32 2.0, %v527
      %v544 = vsub.f32 2.0, %v528
      %v545 = vsub.f32 2.0, %v529
      %v546 = vsub.f32 2.0, %v530
      %v547 = vsub.f32 2.0, %v531
      %v548 = vsub.f32 2.0, %v532
      %v549 = vsub.f32 2.0, %v533
      %v550 = vsub.f32 2.0, %v534
      %v551 = vsub.f32 2.0, %v535
      %v552 = vmul.f32 %v504, %v536
      %v553 = vmul.f32 %v505, %v537
      %v554 = vmul.f32 %v506, %v538
      %v555 = vmul.f32 %v507, %v539
      %v556 = vmul.f32 %v508, %v540
      %v557 = vmul.f32 %v509, %v541
      %v558 = vmul.f32 %v510, %v542
      %v559 = vmul.f32 %v511, %v543
      %v560 = vmul.f32 %v512, %v544
      %v561 = vmul.f32 %v513, %v545
      %v562 = vmul.f32 %v514, %v546
      %v563 = vmul.f32 %v515, %v547
      %v564 = vmul.f32 %v516, %v548
      %v565 = vmul.f32 %v517, %v549
      %v566 = vmul.f32 %v518, %v550
      %v567 = vmul.f32 %v519, %v551
      %v568 = vmul.f32 %v441, %v552
      %v569 = vmul.f32 %v443, %v553
      %v570 = vmul.f32 %v445, %v554
      %v571 = vmul.f32 %v447, %v555
      %v572 = vmul.f32 %v449, %v556
      %v573 = vmul.f32 %v451, %v557
      %v574 = vmul.f32 %v453, %v558
      %v575 = vmul.f32 %v455, %v559
      %v576 = vmul.f32 %v457, %v560
      %v577 = vmul.f32 %v459, %v561
      %v578 = vmul.f32 %v461, %v562
      %v579 = vmul.f32 %v463, %v563
      %v580 = vmul.f32 %v465, %v564
      %v581 = vmul.f32 %v467, %v565
      %v582 = vmul.f32 %v469, %v566
      %v583 = vmul.f32 %v471, %v567
      %vm584 = vcmask 31744
      %585 = vst.msk [vmem:[%s172] sm:$0xff] %vm584, %v568
      %586 = vst.msk [vmem:[%s172 + $0x8] sm:$0xff] %vm584, %v569
      %587 = vst.msk [vmem:[%s172 + $0x10] sm:$0xff] %vm584, %v570
      %588 = vst.msk [vmem:[%s172 + $0x18] sm:$0xff] %vm584, %v571
      %589 = vst.msk [vmem:[%s172 + $0x20] sm:$0xff] %vm584, %v572
      %590 = vst.msk [vmem:[%s172 + $0x28] sm:$0xff] %vm584, %v573
      %591 = vst.msk [vmem:[%s172 + $0x30] sm:$0xff] %vm584, %v574
      %592 = vst.msk [vmem:[%s172 + $0x38] sm:$0xff] %vm584, %v575
      %593 = vst.msk [vmem:[%s172 + $0x40] sm:$0xff] %vm584, %v576
      %594 = vst.msk [vmem:[%s172 + $0x48] sm:$0xff] %vm584, %v577
      %595 = vst.msk [vmem:[%s172 + $0x50] sm:$0xff] %vm584, %v578
      %596 = vst.msk [vmem:[%s172 + $0x58] sm:$0xff] %vm584, %v579
      %597 = vst.msk [vmem:[%s172 + $0x60] sm:$0xff] %vm584, %v580
      %598 = vst.msk [vmem:[%s172 + $0x68] sm:$0xff] %vm584, %v581
      %599 = vst.msk [vmem:[%s172 + $0x70] sm:$0xff] %vm584, %v582
      %600 = vst.msk [vmem:[%s172 + $0x78] sm:$0xff] %vm584, %v583
      %s601 = smul.u32 16, %s14
      %p602 = scmp.lt.s32.totalorder %s601, 127
      %s603 = scalar_select %p602, %s601, 127
      %s604 = smul.addr %s603, 8
      %s605 = scalar_lea.vmem %s3, %s604
      // Predicated region
      $region33: #{tpu_custom_call.1} parent=31 // pred_check
        %p606 = pneg %p100
      $region34: #{tpu_custom_call.1} parent=31 // pred_check_branch
        %608 = sbr.rel (%p606) target = $region36
      $region35: #{tpu_custom_call.1} parent=31 // pred_region
        %s609 = smul.u32 16, %s14
      $region36: #{tpu_custom_call.1} parent=31 // pred_fallthru
        _
    $region32: #{tpu_custom_call.1} parent=5 // pred_fallthru
      _
    %p610 = scmp.le.s32.totalorder 2, %s9
    // Predicated region
    $region37: #{tpu_custom_call.1} parent=5 // pred_check
      %p611 = pneg %p610
    $region38: #{tpu_custom_call.1} parent=5 // pred_check_branch
      %613 = sbr.rel (%p611) target = $region40
    $region39: #{tpu_custom_call.1} parent=5 // pred_region
      %s614 = ssub.s32 %s9, 2
      // Predicated region
      $region41: #{tpu_custom_call.1} parent=39 // pred_check
        %p615 = pneg %p106
      $region42: #{tpu_custom_call.1} parent=39 // pred_check_branch
        %617 = sbr.rel (%p615) target = $region44
      $region43: #{tpu_custom_call.1} parent=39 // pred_region
        %s618 = smul.u32 16, %s15
        %p619 = scmp.lt.s32.totalorder %s618, 127
        %s620 = scalar_select %p619, %s618, 127
        %s621 = smul.addr %s620, 8
        %s622 = scalar_lea.vmem %s3, %s621
      $region44: #{tpu_custom_call.1} parent=39 // pred_fallthru
        _
    $region40: #{tpu_custom_call.1} parent=5 // pred_fallthru
      _
  $region6: #{tpu_custom_call.1} parent=0 // loop_footer
    %s13 = sadd.s32 1, %s9
  $region7: #{tpu_custom_call.1} parent=0 // loop_footer_branch
    %8 = sbr.rel target = $region3
  $region8: #{tpu_custom_call.1} parent=0 // loop_exit
    _

</llo_original>
